<compile_context>
chip_gen: v7x
topology: tpu7x:2x2x1
jax: 0.10.0
libtpu: 0.0.40
codegen_flags: <defaults>
</compile_context>

<pallas_src>
import jax
import jax.numpy as jnp
from jax.experimental import pallas as pl
from jax.experimental.pallas import tpu as pltpu

HIDDEN = 16
NEG_SLOPE = 0.01          # F.leaky_relu default negative_slope
LANE = 128                # TPU lane width
DEFAULT_TB = 512          # batch-tile (rows on the lane axis)


def _round_up(n, m):
    return ((n + m - 1) // m) * m


def _leaky_relu(x):
    return jnp.where(x >= 0, x, NEG_SLOPE * x)


def reinforce_fwd_kernel(xT_ref, w1_ref, b1_ref, w2_ref, b2_ref, w3_ref, b3_ref,
                         outT_ref):
    """Transposed forward: batch on the lane axis.

    xT_ref:  (in_nodes, TB)        -- one batch tile, transposed
    wN_ref:  PyTorch layout [out_features, in_features]
    bN_ref:  column vector [out_features, 1] (broadcasts along lanes)
    outT_ref:(out_nodes, TB)       -- lane-dense probability tile
    """
    xT = xT_ref[...]
    # Biases read once per tile (hoisted broadcasts).
    b1 = b1_ref[...]
    b2 = b2_ref[...]
    b3 = b3_ref[...]

    # fc1 + leaky_relu :  (16, in) @ (in, TB) -> (16, TB)
    h = jnp.dot(w1_ref[...], xT, preferred_element_type=jnp.float32) + b1
    h = _leaky_relu(h)

    # fc2 + leaky_relu :  (16, 16) @ (16, TB) -> (16, TB)
    h = jnp.dot(w2_ref[...], h, preferred_element_type=jnp.float32) + b2
    h = _leaky_relu(h)

    # out :  (out, 16) @ (16, TB) -> (out, TB)
    logits = jnp.dot(w3_ref[...], h, preferred_element_type=jnp.float32) + b3

    # Numerically-stable softmax over the class axis (sublane axis, size=out).
    m = jnp.max(logits, axis=0, keepdims=True)           # (1, TB)
    e = jnp.exp(logits - m)                               # (out, TB)
    denom = jnp.sum(e, axis=0, keepdims=True)             # (1, TB)
    outT_ref[...] = e * pl.reciprocal(denom)              # one recip per column


def reinforce_forward(x, params, *, tb=DEFAULT_TB):
    """x: [batch, input_nodes] float32.  Returns [batch, output_nodes] probs."""
    w1, b1, w2, b2, w3, b3 = (params["w1"], params["b1"], params["w2"],
                              params["b2"], params["w3"], params["b3"])
    batch, in_nodes = x.shape
    out_nodes = w3.shape[0]

    # Pad the batch to a multiple of the lane-aligned tile size.
    padded = _round_up(batch, LANE)
    tb = min(tb, padded)
    padded = _round_up(padded, tb)

    # Host-side layout plumbing: present x transposed (features x batch) so the
    # kernel's matmuls and stores are lane-dense over the batch axis.
    xT = jnp.pad(x, ((0, padded - batch), (0, 0))).T       # (in_nodes, padded)

    grid = (padded // tb,)
    const2d = lambda i: (0, 0)                             # grid-invariant blocks

    probsT = pl.pallas_call(
        reinforce_fwd_kernel,
        out_shape=jax.ShapeDtypeStruct((out_nodes, padded), jnp.float32),
        grid=grid,
        in_specs=[
            pl.BlockSpec((in_nodes, tb), lambda i: (0, i)),        # x tile
            pl.BlockSpec((HIDDEN, in_nodes), const2d),             # w1 (resident)
            pl.BlockSpec((HIDDEN, 1), const2d),                    # b1
            pl.BlockSpec((HIDDEN, HIDDEN), const2d),               # w2
            pl.BlockSpec((HIDDEN, 1), const2d),                    # b2
            pl.BlockSpec((out_nodes, HIDDEN), const2d),            # w3
            pl.BlockSpec((out_nodes, 1), const2d),                 # b3
        ],
        out_specs=pl.BlockSpec((out_nodes, tb), lambda i: (0, i)),  # lane-dense
        compiler_params=pltpu.CompilerParams(
            dimension_semantics=("parallel",)),                    # megacore split
    )(xT, w1, b1, w2, b2, w3, b3)

    # Un-pack back to [batch, out_nodes].
    return probsT[:, :batch].T


def init_params(key, input_nodes, output_nodes):
    """Deterministic synthetic init; weights in PyTorch nn.Linear layout [out, in]."""
    k1, k2, k3, k4, k5, k6 = jax.random.split(key, 6)
    scale = 0.1
    return {
        "w1": scale * jax.random.normal(k1, (HIDDEN, input_nodes), jnp.float32),
        "b1": scale * jax.random.normal(k2, (HIDDEN, 1), jnp.float32),
        "w2": scale * jax.random.normal(k3, (HIDDEN, HIDDEN), jnp.float32),
        "b2": scale * jax.random.normal(k4, (HIDDEN, 1), jnp.float32),
        "w3": scale * jax.random.normal(k5, (output_nodes, HIDDEN), jnp.float32),
        "b3": scale * jax.random.normal(k6, (output_nodes, 1), jnp.float32),
    }


if __name__ == "__main__":
    key = jax.random.PRNGKey(0)
    kx, kp = jax.random.split(key)

    batch = 1000          # rollout-sized batch: exercises padding + 2 grid tiles
    input_nodes = 8       # observation dim
    output_nodes = 4      # number of discrete actions

    x = jax.random.normal(kx, (batch, input_nodes), jnp.float32)
    params = init_params(kp, input_nodes, output_nodes)

    probs = reinforce_forward(x, params)
    probs = jax.block_until_ready(probs)

    # sanity: valid probability distribution per row
    assert probs.shape == (batch, output_nodes)
    assert jnp.allclose(jnp.sum(probs, axis=-1), 1.0, atol=1e-5)

    # reference check in plain JAX (PyTorch semantics: x @ W.T + b)
    def ref(x, p):
        h = x @ p["w1"].T + p["b1"][:, 0]
        h = jnp.where(h >= 0, h, NEG_SLOPE * h)
        h = h @ p["w2"].T + p["b2"][:, 0]
        h = jnp.where(h >= 0, h, NEG_SLOPE * h)
        logits = h @ p["w3"].T + p["b3"][:, 0]
        return jax.nn.softmax(logits, axis=-1)

    assert jnp.allclose(probs, ref(x, params), atol=1e-4)

    print("KERNEL_OK")
</pallas_src>

<mosaic_0001>
module attributes {stable_mosaic.version = 11 : i64} {
  func.func @reinforce_fwd_kernel(%arg0: i32, %arg1: memref<8x512xf32, #tpu.memory_space<vmem>>, %arg2: memref<16x8xf32, #tpu.memory_space<vmem>>, %arg3: memref<16x1xf32, #tpu.memory_space<vmem>>, %arg4: memref<16x16xf32, #tpu.memory_space<vmem>>, %arg5: memref<16x1xf32, #tpu.memory_space<vmem>>, %arg6: memref<4x16xf32, #tpu.memory_space<vmem>>, %arg7: memref<4x1xf32, #tpu.memory_space<vmem>>, %arg8: memref<4x512xf32, #tpu.memory_space<vmem>>) attributes {dimension_semantics = [#tpu.dimension_semantics<parallel>], iteration_bounds = array<i64: 2>, scalar_prefetch = 0 : i64, scratch_operands = 0 : i64, tpu.core_type = #tpu.core_type<tc>, window_params = [{transform_indices = @transform_0, window_bounds = array<i64: 8, 512>}, {pipeline_mode = #tpu.pipeline_mode<synchronous>, transform_indices = @transform_1, window_bounds = array<i64: 16, 8>}, {pipeline_mode = #tpu.pipeline_mode<synchronous>, transform_indices = @transform_2, window_bounds = array<i64: 16, 1>}, {pipeline_mode = #tpu.pipeline_mode<synchronous>, transform_indices = @transform_3, window_bounds = array<i64: 16, 16>}, {pipeline_mode = #tpu.pipeline_mode<synchronous>, transform_indices = @transform_4, window_bounds = array<i64: 16, 1>}, {pipeline_mode = #tpu.pipeline_mode<synchronous>, transform_indices = @transform_5, window_bounds = array<i64: 4, 16>}, {pipeline_mode = #tpu.pipeline_mode<synchronous>, transform_indices = @transform_6, window_bounds = array<i64: 4, 1>}, {transform_indices = @transform_7, window_bounds = array<i64: 4, 512>}]} {
    %c0 = arith.constant 0 : index
    %c0_0 = arith.constant 0 : index
    %0 = vector.load %arg1[%c0, %c0_0] : memref<8x512xf32, #tpu.memory_space<vmem>>, vector<8x512xf32>
    %c0_1 = arith.constant 0 : index
    %c0_2 = arith.constant 0 : index
    %1 = vector.load %arg3[%c0_1, %c0_2] : memref<16x1xf32, #tpu.memory_space<vmem>>, vector<16x1xf32>
    %c0_3 = arith.constant 0 : index
    %c0_4 = arith.constant 0 : index
    %2 = vector.load %arg5[%c0_3, %c0_4] : memref<16x1xf32, #tpu.memory_space<vmem>>, vector<16x1xf32>
    %c0_5 = arith.constant 0 : index
    %c0_6 = arith.constant 0 : index
    %3 = vector.load %arg7[%c0_5, %c0_6] : memref<4x1xf32, #tpu.memory_space<vmem>>, vector<4x1xf32>
    %c0_7 = arith.constant 0 : index
    %c0_8 = arith.constant 0 : index
    %4 = vector.load %arg2[%c0_7, %c0_8] : memref<16x8xf32, #tpu.memory_space<vmem>>, vector<16x8xf32>
    %cst = arith.constant dense<0.000000e+00> : vector<16x512xf32>
    %5 = tpu.matmul %4, %0, %cst {dimension_numbers = #tpu.dot_dimension_numbers<[1], [0], [0], [1], [0, 0, 1, 1], [], []>} : vector<16x8xf32>, vector<8x512xf32>, vector<16x512xf32> -> vector<16x512xf32>
    %6 = vector.broadcast %1 : vector<16x1xf32> to vector<16x512xf32>
    %7 = arith.addf %5, %6 : vector<16x512xf32>
    %cst_9 = arith.constant 0.000000e+00 : f32
    %8 = vector.broadcast %cst_9 : f32 to vector<16x512xf32>
    %9 = arith.cmpf oge, %7, %8 : vector<16x512xf32>
    %cst_10 = arith.constant 0.00999999977 : f32
    %10 = vector.broadcast %cst_10 : f32 to vector<16x512xf32>
    %11 = arith.mulf %10, %7 : vector<16x512xf32>
    %12 = arith.select %9, %7, %11 : vector<16x512xi1>, vector<16x512xf32>
    %c0_11 = arith.constant 0 : index
    %c0_12 = arith.constant 0 : index
    %13 = vector.load %arg4[%c0_11, %c0_12] : memref<16x16xf32, #tpu.memory_space<vmem>>, vector<16x16xf32>
    %cst_13 = arith.constant dense<0.000000e+00> : vector<16x512xf32>
    %14 = tpu.matmul %13, %12, %cst_13 {dimension_numbers = #tpu.dot_dimension_numbers<[1], [0], [0], [1], [0, 0, 1, 1], [], []>} : vector<16x16xf32>, vector<16x512xf32>, vector<16x512xf32> -> vector<16x512xf32>
    %15 = vector.broadcast %2 : vector<16x1xf32> to vector<16x512xf32>
    %16 = arith.addf %14, %15 : vector<16x512xf32>
    %cst_14 = arith.constant 0.000000e+00 : f32
    %17 = vector.broadcast %cst_14 : f32 to vector<16x512xf32>
    %18 = arith.cmpf oge, %16, %17 : vector<16x512xf32>
    %cst_15 = arith.constant 0.00999999977 : f32
    %19 = vector.broadcast %cst_15 : f32 to vector<16x512xf32>
    %20 = arith.mulf %19, %16 : vector<16x512xf32>
    %21 = arith.select %18, %16, %20 : vector<16x512xi1>, vector<16x512xf32>
    %c0_16 = arith.constant 0 : index
    %c0_17 = arith.constant 0 : index
    %22 = vector.load %arg6[%c0_16, %c0_17] : memref<4x16xf32, #tpu.memory_space<vmem>>, vector<4x16xf32>
    %cst_18 = arith.constant dense<0.000000e+00> : vector<4x512xf32>
    %23 = tpu.matmul %22, %21, %cst_18 {dimension_numbers = #tpu.dot_dimension_numbers<[1], [0], [0], [1], [0, 0, 1, 1], [], []>} : vector<4x16xf32>, vector<16x512xf32>, vector<4x512xf32> -> vector<4x512xf32>
    %24 = vector.broadcast %3 : vector<4x1xf32> to vector<4x512xf32>
    %25 = arith.addf %23, %24 : vector<4x512xf32>
    %cst_19 = arith.constant dense<0xFF800000> : vector<512xf32>
    %26 = vector.multi_reduction <maximumf>, %25, %cst_19 [0] : vector<4x512xf32> to vector<512xf32>
    %27 = vector.shape_cast %26 : vector<512xf32> to vector<1x512xf32>
    %28 = vector.broadcast %27 : vector<1x512xf32> to vector<4x512xf32>
    %29 = arith.subf %25, %28 : vector<4x512xf32>
    %30 = math.exp %29 : vector<4x512xf32>
    %cst_20 = arith.constant dense<0.000000e+00> : vector<512xf32>
    %31 = vector.multi_reduction <add>, %30, %cst_20 [0] : vector<4x512xf32> to vector<512xf32>
    %32 = vector.shape_cast %31 : vector<512xf32> to vector<1x512xf32>
    %33 = tpu.reciprocal %32 : vector<1x512xf32> -> vector<1x512xf32>
    %34 = vector.broadcast %33 : vector<1x512xf32> to vector<4x512xf32>
    %35 = arith.mulf %30, %34 : vector<4x512xf32>
    %c0_21 = arith.constant 0 : index
    %c0_22 = arith.constant 0 : index
    %36 = vector.load %arg8[%c0_21, %c0_22] : memref<4x512xf32, #tpu.memory_space<vmem>>, vector<4x512xf32>
    tpu.vector_store %arg8[%c0_21, %c0_22], %35 {strides = array<i32>} : memref<4x512xf32, #tpu.memory_space<vmem>>, vector<4x512xf32>,
    return
  }
  func.func @transform_0(%arg0: i32) -> (i32, i32) {
    %c0_i32 = arith.constant 0 : i32
    %c0_i32_0 = arith.constant 0 : i32
    return %c0_i32, %arg0 : i32, i32
  }
  func.func @transform_1(%arg0: i32) -> (i32, i32) {
    %c0_i32 = arith.constant 0 : i32
    %c0_i32_0 = arith.constant 0 : i32
    %c0_i32_1 = arith.constant 0 : i32
    return %c0_i32, %c0_i32_0 : i32, i32
  }
  func.func @transform_2(%arg0: i32) -> (i32, i32) {
    %c0_i32 = arith.constant 0 : i32
    %c0_i32_0 = arith.constant 0 : i32
    %c0_i32_1 = arith.constant 0 : i32
    return %c0_i32, %c0_i32_0 : i32, i32
  }
  func.func @transform_3(%arg0: i32) -> (i32, i32) {
    %c0_i32 = arith.constant 0 : i32
    %c0_i32_0 = arith.constant 0 : i32
    %c0_i32_1 = arith.constant 0 : i32
    return %c0_i32, %c0_i32_0 : i32, i32
  }
  func.func @transform_4(%arg0: i32) -> (i32, i32) {
    %c0_i32 = arith.constant 0 : i32
    %c0_i32_0 = arith.constant 0 : i32
    %c0_i32_1 = arith.constant 0 : i32
    return %c0_i32, %c0_i32_0 : i32, i32
  }
  func.func @transform_5(%arg0: i32) -> (i32, i32) {
    %c0_i32 = arith.constant 0 : i32
    %c0_i32_0 = arith.constant 0 : i32
    %c0_i32_1 = arith.constant 0 : i32
    return %c0_i32, %c0_i32_0 : i32, i32
  }
  func.func @transform_6(%arg0: i32) -> (i32, i32) {
    %c0_i32 = arith.constant 0 : i32
    %c0_i32_0 = arith.constant 0 : i32
    %c0_i32_1 = arith.constant 0 : i32
    return %c0_i32, %c0_i32_0 : i32, i32
  }
  func.func @transform_7(%arg0: i32) -> (i32, i32) {
    %c0_i32 = arith.constant 0 : i32
    %c0_i32_0 = arith.constant 0 : i32
    return %c0_i32, %arg0 : i32, i32
  }
}

</mosaic_0001>

<llo_original>
// kernel: tpu_custom_call.1
$region0: #{tpu_custom_call.1}
  #allocation0 [shape = 'u32[]', space=smem, size = 0x4, offset = 0x4, fixed_abs, tag = 'smem constant byte address 0x4 - core index']
  #allocation1 [shape = 'u32[144,128]{1,0:T(1,128)}', space=vmem, size = 0x12000, scoped, tag = 'internal scratch']
  %s0 = inlined_call_operand.hbm [shape: f32[8,1024], index: 0, kind: input, shape index: {}]
  %s1 = inlined_call_operand.vmem [shape: f32[16,8], index: 1, kind: input, shape index: {}]
  %s2 = inlined_call_operand.vmem [shape: f32[16,1], index: 2, kind: input, shape index: {}]
  %s3 = inlined_call_operand.vmem [shape: f32[16,16], index: 3, kind: input, shape index: {}]
  %s4 = inlined_call_operand.vmem [shape: f32[16,1], index: 4, kind: input, shape index: {}]
  %s5 = inlined_call_operand.vmem [shape: f32[4,16], index: 5, kind: input, shape index: {}]
  %s6 = inlined_call_operand.vmem [shape: f32[4,1], index: 6, kind: input, shape index: {}]
  %s7 = inlined_call_operand.hbm [shape: f32[4,1024], index: 7, kind: output, shape index: {}]
  %s8 = sld [smem:[#allocation0]]
  $region65: #{tpu_custom_call.1} parent=0
    _
  %s10 = ssub.s32 1, %s8
  %s11 = scalar_select 0, %s10, %s8
  $region1: #{tpu_custom_call.1} parent=0
    #allocation2 [shape = 'u8[32768]{0}', space=vmem, size = 0x8000, scoped, tag = 'input window, operand 0']
    #allocation3 [shape = 's32[2]{0}', space=sflag, size = 0x8, scoped, tag = 'scoped memory for tpu_custom_call.1']
    #allocation4 [shape = 's32[2]{0}', space=sflag, size = 0x8, scoped, tag = 'scoped memory for tpu_custom_call.1']
    #allocation5 [shape = 'u8[16384]{0}', space=vmem, size = 0x4000, scoped, tag = 'output window, operand 0']
    %12 = vsyncpa [#allocation3], 0
    %s13 = scalar_lea.sflag [#allocation3], 1
    %14 = vsyncpa %s13, 0
    %15 = vsyncpa [#allocation4], 0
    %s16 = scalar_lea.sflag [#allocation4], 1
    %17 = vsyncpa %s16, 0
    loop: start=0, step=1, limit=4
    $region2: #{tpu_custom_call.1} parent=1 // loop_pre_header
      _
    $region3: #{tpu_custom_call.1} parent=1 // loop_header
      %s19 = sphi 0, %s23
      %p20 = scmp.ge.s32.totalorder %s19, 4
      %s29 = sphi 0, %s31
      %s32 = sphi 0, %s29
      %s33 = sphi 0, %s32
      %s49 = sphi 0, %s33
      %s53 = sphi 0, %s53
      %s55 = sphi 0, %s53
      %s56 = sphi 0, %s55
      %s70 = sphi 0, %s56
      %s74 = sphi 0, %s74
      %s76 = sphi 0, %s74
      %s77 = sphi 0, %s76
      %s91 = sphi 0, %s77
      %s95 = sphi 0, %s95
      %s97 = sphi 0, %s95
      %s98 = sphi 0, %s97
      %s112 = sphi 0, %s98
      %s116 = sphi 0, %s116
      %s118 = sphi 0, %s116
      %s119 = sphi 0, %s118
      %s133 = sphi 0, %s119
      %s137 = sphi 0, %s137
      %s139 = sphi 0, %s137
      %s140 = sphi 0, %s139
      %s154 = sphi 0, %s140
      %s158 = sphi 0, %s158
      %s160 = sphi 0, %s158
      %s161 = sphi 0, %s160
      %s175 = sphi 0, %s161
      %s181 = sphi 0, %s183
      %s184 = sphi 0, %s181
      %s185 = sphi 0, %s184
      %s201 = sphi 0, %s185
    $region4: #{tpu_custom_call.1} parent=1 // loop_header_branch
      %22 = sbr.rel (%p20) target = $region8
    $region5: #{tpu_custom_call.1} parent=1 // loop_body
      %s24 = ssub.s32 %s19, 1
      %s25 = ssub.s32 %s19, 2
      %s26 = sadd.s32 %s19, 1
      %s27 = ssub.s32 %s19, %s26
      %p28 = scmp.eq.s32.totalorder %s27, 0
      %s30 = sadd.s32 %s29, 1
      %s31 = scalar_select %p28, %s29, %s30
      %p34 = pneg %p28
      %p35 = scmp.eq.s32.totalorder %s19, 1
      %p36 = por %p34, %p35
      %p37 = scmp.ne.s32.totalorder %s29, %s32
      %p38 = scmp.eq.s32.totalorder %s19, 0
      %p39 = por %p37, %p38
      %p40 = scmp.ne.s32.totalorder %s29, %s32
      %p41 = scmp.eq.s32.totalorder %s24, 1
      %p42 = por %p40, %p41
      %p43 = scmp.ne.s32.totalorder %s32, %s33
      %p44 = scmp.eq.s32.totalorder %s24, 0
      %p45 = por %p43, %p44
      %p46 = scmp.ne.s32.totalorder %s32, %s33
      %p47 = scmp.eq.s32.totalorder %s25, 1
      %p48 = por %p46, %p47
      %p50 = scmp.ne.s32.totalorder %s33, %s49
      %p51 = scmp.eq.s32.totalorder %s25, 0
      %p52 = por %p50, %p51
      %s54 = sadd.s32 %s53, 1
      %p57 = scmp.eq.s32.totalorder %s19, 1
      %p58 = scmp.ne.s32.totalorder %s53, %s55
      %p59 = scmp.eq.s32.totalorder %s19, 0
      %p60 = por %p58, %p59
      %p61 = scmp.ne.s32.totalorder %s53, %s55
      %p62 = scmp.eq.s32.totalorder %s24, 1
      %p63 = por %p61, %p62
      %p64 = scmp.ne.s32.totalorder %s55, %s56
      %p65 = scmp.eq.s32.totalorder %s24, 0
      %p66 = por %p64, %p65
      %p67 = scmp.ne.s32.totalorder %s55, %s56
      %p68 = scmp.eq.s32.totalorder %s25, 1
      %p69 = por %p67, %p68
      %p71 = scmp.ne.s32.totalorder %s56, %s70
      %p72 = scmp.eq.s32.totalorder %s25, 0
      %p73 = por %p71, %p72
      %s75 = sadd.s32 %s74, 1
      %p78 = scmp.eq.s32.totalorder %s19, 1
      %p79 = scmp.ne.s32.totalorder %s74, %s76
      %p80 = scmp.eq.s32.totalorder %s19, 0
      %p81 = por %p79, %p80
      %p82 = scmp.ne.s32.totalorder %s74, %s76
      %p83 = scmp.eq.s32.totalorder %s24, 1
      %p84 = por %p82, %p83
      %p85 = scmp.ne.s32.totalorder %s76, %s77
      %p86 = scmp.eq.s32.totalorder %s24, 0
      %p87 = por %p85, %p86
      %p88 = scmp.ne.s32.totalorder %s76, %s77
      %p89 = scmp.eq.s32.totalorder %s25, 1
      %p90 = por %p88, %p89
      %p92 = scmp.ne.s32.totalorder %s77, %s91
      %p93 = scmp.eq.s32.totalorder %s25, 0
      %p94 = por %p92, %p93
      %s96 = sadd.s32 %s95, 1
      %p99 = scmp.eq.s32.totalorder %s19, 1
      %p100 = scmp.ne.s32.totalorder %s95, %s97
      %p101 = scmp.eq.s32.totalorder %s19, 0
      %p102 = por %p100, %p101
      %p103 = scmp.ne.s32.totalorder %s95, %s97
      %p104 = scmp.eq.s32.totalorder %s24, 1
      %p105 = por %p103, %p104
      %p106 = scmp.ne.s32.totalorder %s97, %s98
      %p107 = scmp.eq.s32.totalorder %s24, 0
      %p108 = por %p106, %p107
      %p109 = scmp.ne.s32.totalorder %s97, %s98
      %p110 = scmp.eq.s32.totalorder %s25, 1
      %p111 = por %p109, %p110
      %p113 = scmp.ne.s32.totalorder %s98, %s112
      %p114 = scmp.eq.s32.totalorder %s25, 0
      %p115 = por %p113, %p114
      %s117 = sadd.s32 %s116, 1
      %p120 = scmp.eq.s32.totalorder %s19, 1
      %p121 = scmp.ne.s32.totalorder %s116, %s118
      %p122 = scmp.eq.s32.totalorder %s19, 0
      %p123 = por %p121, %p122
      %p124 = scmp.ne.s32.totalorder %s116, %s118
      %p125 = scmp.eq.s32.totalorder %s24, 1
      %p126 = por %p124, %p125
      %p127 = scmp.ne.s32.totalorder %s118, %s119
      %p128 = scmp.eq.s32.totalorder %s24, 0
      %p129 = por %p127, %p128
      %p130 = scmp.ne.s32.totalorder %s118, %s119
      %p131 = scmp.eq.s32.totalorder %s25, 1
      %p132 = por %p130, %p131
      %p134 = scmp.ne.s32.totalorder %s119, %s133
      %p135 = scmp.eq.s32.totalorder %s25, 0
      %p136 = por %p134, %p135
      %s138 = sadd.s32 %s137, 1
      %p141 = scmp.eq.s32.totalorder %s19, 1
      %p142 = scmp.ne.s32.totalorder %s137, %s139
      %p143 = scmp.eq.s32.totalorder %s19, 0
      %p144 = por %p142, %p143
      %p145 = scmp.ne.s32.totalorder %s137, %s139
      %p146 = scmp.eq.s32.totalorder %s24, 1
      %p147 = por %p145, %p146
      %p148 = scmp.ne.s32.totalorder %s139, %s140
      %p149 = scmp.eq.s32.totalorder %s24, 0
      %p150 = por %p148, %p149
      %p151 = scmp.ne.s32.totalorder %s139, %s140
      %p152 = scmp.eq.s32.totalorder %s25, 1
      %p153 = por %p151, %p152
      %p155 = scmp.ne.s32.totalorder %s140, %s154
      %p156 = scmp.eq.s32.totalorder %s25, 0
      %p157 = por %p155, %p156
      %s159 = sadd.s32 %s158, 1
      %p162 = scmp.eq.s32.totalorder %s19, 1
      %p163 = scmp.ne.s32.totalorder %s158, %s160
      %p164 = scmp.eq.s32.totalorder %s19, 0
      %p165 = por %p163, %p164
      %p166 = scmp.ne.s32.totalorder %s158, %s160
      %p167 = scmp.eq.s32.totalorder %s24, 1
      %p168 = por %p166, %p167
      %p169 = scmp.ne.s32.totalorder %s160, %s161
      %p170 = scmp.eq.s32.totalorder %s24, 0
      %p171 = por %p169, %p170
      %p172 = scmp.ne.s32.totalorder %s160, %s161
      %p173 = scmp.eq.s32.totalorder %s25, 1
      %p174 = por %p172, %p173
      %p176 = scmp.ne.s32.totalorder %s161, %s175
      %p177 = scmp.eq.s32.totalorder %s25, 0
      %p178 = por %p176, %p177
      %s179 = ssub.s32 %s19, %s26
      %p180 = scmp.eq.s32.totalorder %s179, 0
      %s182 = sadd.s32 %s181, 1
      %s183 = scalar_select %p180, %s181, %s182
      %p186 = pneg %p180
      %p187 = scmp.eq.s32.totalorder %s19, 1
      %p188 = por %p186, %p187
      %p189 = scmp.ne.s32.totalorder %s181, %s184
      %p190 = scmp.eq.s32.totalorder %s19, 0
      %p191 = por %p189, %p190
      %p192 = scmp.ne.s32.totalorder %s181, %s184
      %p193 = scmp.eq.s32.totalorder %s24, 1
      %p194 = por %p192, %p193
      %p195 = scmp.ne.s32.totalorder %s184, %s185
      %p196 = scmp.eq.s32.totalorder %s24, 0
      %p197 = por %p195, %p196
      %p198 = scmp.ne.s32.totalorder %s184, %s185
      %p199 = scmp.eq.s32.totalorder %s25, 1
      %p200 = por %p198, %p199
      %p202 = scmp.ne.s32.totalorder %s185, %s201
      %p203 = scmp.eq.s32.totalorder %s25, 0
      %p204 = por %p202, %p203
      %p205 = scmp.le.s32.totalorder 1, %s19
      %p206 = scmp.lt.s32.totalorder %s19, 3
      %p207 = pnand %p205, %p206
      %p208 = pneg %p207
      // Predicated region
      $region9: #{tpu_custom_call.1} parent=5 // pred_check
        _
      $region10: #{tpu_custom_call.1} parent=5 // pred_check_branch
        %210 = sbr.rel (%p207) target = $region12
      $region11: #{tpu_custom_call.1} parent=5 // pred_region
        %s211 = ssub.s32 %s19, 1
        // Predicated region
        $region13: #{tpu_custom_call.1} parent=11 // pred_check
          %p212 = pneg %p66
        $region14: #{tpu_custom_call.1} parent=11 // pred_check_branch
          %214 = sbr.rel (%p212) target = $region16
        $region15: #{tpu_custom_call.1} parent=11 // pred_region
          _
        $region16: #{tpu_custom_call.1} parent=11 // pred_fallthru
          _
        // Predicated region
        $region17: #{tpu_custom_call.1} parent=11 // pred_check
          %p215 = pneg %p87
        $region18: #{tpu_custom_call.1} parent=11 // pred_check_branch
          %217 = sbr.rel (%p215) target = $region20
        $region19: #{tpu_custom_call.1} parent=11 // pred_region
          _
        $region20: #{tpu_custom_call.1} parent=11 // pred_fallthru
          _
        // Predicated region
        $region21: #{tpu_custom_call.1} parent=11 // pred_check
          %p218 = pneg %p108
        $region22: #{tpu_custom_call.1} parent=11 // pred_check_branch
          %220 = sbr.rel (%p218) target = $region24
        $region23: #{tpu_custom_call.1} parent=11 // pred_region
          _
        $region24: #{tpu_custom_call.1} parent=11 // pred_fallthru
          _
        // Predicated region
        $region25: #{tpu_custom_call.1} parent=11 // pred_check
          %p221 = pneg %p129
        $region26: #{tpu_custom_call.1} parent=11 // pred_check_branch
          %223 = sbr.rel (%p221) target = $region28
        $region27: #{tpu_custom_call.1} parent=11 // pred_region
          _
        $region28: #{tpu_custom_call.1} parent=11 // pred_fallthru
          _
        // Predicated region
        $region29: #{tpu_custom_call.1} parent=11 // pred_check
          %p224 = pneg %p150
        $region30: #{tpu_custom_call.1} parent=11 // pred_check_branch
          %226 = sbr.rel (%p224) target = $region32
        $region31: #{tpu_custom_call.1} parent=11 // pred_region
          _
        $region32: #{tpu_custom_call.1} parent=11 // pred_fallthru
          _
        // Predicated region
        $region33: #{tpu_custom_call.1} parent=11 // pred_check
          %p227 = pneg %p171
        $region34: #{tpu_custom_call.1} parent=11 // pred_check_branch
          %229 = sbr.rel (%p227) target = $region36
        $region35: #{tpu_custom_call.1} parent=11 // pred_region
          _
        $region36: #{tpu_custom_call.1} parent=11 // pred_fallthru
          _
      $region12: #{tpu_custom_call.1} parent=5 // pred_fallthru
        _
      %p230 = scmp.lt.s32.totalorder %s19, 2
      // Predicated region
      $region37: #{tpu_custom_call.1} parent=5 // pred_check
        %p231 = pneg %p230
      $region38: #{tpu_custom_call.1} parent=5 // pred_check_branch
        %233 = sbr.rel (%p231) target = $region40
      $region39: #{tpu_custom_call.1} parent=5 // pred_region
        // Predicated region
        $region41: #{tpu_custom_call.1} parent=39 // pred_check
          %p234 = pneg %p39
        $region42: #{tpu_custom_call.1} parent=39 // pred_check_branch
          %236 = sbr.rel (%p234) target = $region44
        $region43: #{tpu_custom_call.1} parent=39 // pred_region
          %s237 = sand.u32 %s29, 1
          %s238 = scalar_lea.sflag [#allocation3], %s237
          %s239 = sand.u32 %s29, 1
          %s240 = smul.addr %s239, 32
          %s241 = scalar_lea.vmem [#allocation2], %s240
          %s242 = smul.u32 4, %s19
          %s244 = ssub.s32 512, 512
          %245 = vsyncadd %s238, %s244
          %s246 = smul.addr %s242, 128
          %s247 = scalar_lea.hbm %s0, %s246
          %s249 = sshll.u32 %s241, 4
          %s250 = int_to_ptr.vmem [resolvable:$true] %s249
          %252 = dma.hbm_to_vmem [thread:$0]  %s247, 512, %s250, %s238
        $region44: #{tpu_custom_call.1} parent=39 // pred_fallthru
          _
      $region40: #{tpu_custom_call.1} parent=5 // pred_fallthru
        _
      %p253 = scmp.le.s32.totalorder 1, %s19
      %p254 = scmp.lt.s32.totalorder %s19, 3
      %p255 = pnand %p253, %p254
      %p256 = pneg %p255
      // Predicated region
      $region45: #{tpu_custom_call.1} parent=5 // pred_check
        _
      $region46: #{tpu_custom_call.1} parent=5 // pred_check_branch
        %258 = sbr.rel (%p255) target = $region48
      $region47: #{tpu_custom_call.1} parent=5 // pred_region
        %s259 = ssub.s32 %s19, 1
        %s260 = sand.u32 %s32, 1
        %s261 = scalar_lea.sflag [#allocation3], %s260
        %s262 = sand.u32 %s32, 1
        %s263 = smul.addr %s262, 32
        %s264 = scalar_lea.vmem [#allocation2], %s263
        // Predicated region
        $region49: #{tpu_custom_call.1} parent=47 // pred_check
          %p265 = pneg %p45
        $region50: #{tpu_custom_call.1} parent=47 // pred_check_branch
          %267 = sbr.rel (%p265) target = $region52
        $region51: #{tpu_custom_call.1} parent=47 // pred_region
          %268 = dma.done %s261, 512
        $region52: #{tpu_custom_call.1} parent=47 // pred_fallthru
          _
        %s269 = sand.u32 %s32, 1
        %s270 = scalar_lea.sflag [#allocation3], %s269
        %s271 = sand.u32 %s32, 1
        %s272 = smul.addr %s271, 32
        %s273 = scalar_lea.vmem [#allocation2], %s272
        %p274 = pneg %p45
        %p275 = pneg %p42
        %p276 = pneg %p66
        %p277 = pneg %p63
        %p278 = pneg %p87
        %p279 = pneg %p84
        %p280 = pneg %p108
        %p281 = pneg %p105
        %p282 = pneg %p129
        %p283 = pneg %p126
        %p284 = pneg %p150
        %p285 = pneg %p147
        %p286 = pneg %p171
        %p287 = pneg %p168
        %p288 = pneg %p197
        %p289 = pneg %p194
        %s290 = sand.u32 %s184, 1
        %s291 = scalar_lea.sflag [#allocation4], %s290
        %s292 = sand.u32 %s184, 1
        %s293 = smul.addr %s292, 16
        %s294 = scalar_lea.vmem [#allocation5], %s293
        %s295 = smul.u32 4, %s24
        %s296 = smul.u32 4, %s24
        %v297 = vld [vmem:[%s264] sm:$0xff]
        %v298 = vld [vmem:[%s264 + $0x8] sm:$0xff]
        %v299 = vld [vmem:[%s264 + $0x10] sm:$0xff]
        %v300 = vld [vmem:[%s264 + $0x18] sm:$0xff]
        %v301 = vld [vmem:[%s2] sm:$0xff]
        %v302 = vld [vmem:[%s2 + $0x8] sm:$0xff]
        %v303 = vld [vmem:[%s4] sm:$0xff]
        %v304 = vld [vmem:[%s4 + $0x8] sm:$0xff]
        %v305 = vld [vmem:[%s6] sm:$0xf]
        %v306 = vld [vmem:[%s1] sm:$0xff]
        %v307 = vld [vmem:[%s1 + $0x8] sm:$0xff]
        %309 = vset.pattern.permute.xlu0 0
        %310 = vperm.xlu0 %309, %v301
        %v311 = vpop.permute.xlu0 %310
        %314 = vset.pattern.permute.xlu0 0
        %315 = vperm.xlu0 %314, %v302
        %v316 = vpop.permute.xlu0 %315
        %vm318 = vcmask 64512
        %v320 = vsel %vm318, %v306, 0
        %v323 = vsel %vm318, %v307, 0
        %325 = vmatprep.subr.mxu0 %v298
        %326 = vmatpush1.msra.mxu0 %v297
        %327 = vmatprep.subr.mxu0 0.0
        %328 = vmatpush1.msra.mxu0 0.0
        %329 = vmatprep.subr.mxu0 0.0
        %330 = vmatpush1.msra.mxu0 0.0
        %331 = vmatprep.subr.mxu0 0.0
        %332 = vmatpush1.msra.mxu0 0.0
        %333 = vmatprep.subr.mxu0 0.0
        %334 = vmatpush1.msra.mxu0 0.0
        %335 = vmatprep.subr.mxu0 0.0
        %336 = vmatpush1.msra.mxu0 0.0
        %337 = vmatprep.subr.mxu0 0.0
        %338 = vmatpush1.msra.mxu0 0.0
        %339 = vmatprep.subr.mxu0 0.0
        %340 = vmatpush1.msra.mxu0 0.0
        %341 = vmatprep.subr.mxu0 0.0
        %342 = vmatpush1.msra.mxu0 0.0
        %343 = vmatprep.subr.mxu0 0.0
        %344 = vmatpush1.msra.mxu0 0.0
        %345 = vmatprep.subr.mxu0 0.0
        %346 = vmatpush1.msra.mxu0 0.0
        %347 = vmatprep.subr.mxu0 0.0
        %348 = vmatpush1.msra.mxu0 0.0
        %349 = vmatprep.subr.mxu0 0.0
        %350 = vmatpush1.msra.mxu0 0.0
        %351 = vmatprep.subr.mxu0 0.0
        %352 = vmatpush1.msra.mxu0 0.0
        %353 = vmatprep.subr.mxu0 0.0
        %354 = vmatpush1.msra.mxu0 0.0
        %355 = vmatprep.subr.mxu0 0.0
        %356 = vmatpush1.msra.mxu0 0.0
        %357 = vmatprep.subr.mxu0 0.0
        %358 = vmatpush1.msra.mxu0 0.0
        %359 = vmatprep.subr.mxu0 0.0
        %360 = vmatpush1.msra.mxu0 0.0
        %361 = vmatprep.subr.mxu0 0.0
        %362 = vmatpush1.msra.mxu0 0.0
        %363 = vmatprep.subr.mxu0 0.0
        %364 = vmatpush1.msra.mxu0 0.0
        %365 = vmatprep.subr.mxu0 0.0
        %366 = vmatpush1.msra.mxu0 0.0
        %367 = vmatprep.subr.mxu0 0.0
        %368 = vmatpush1.msra.mxu0 0.0
        %369 = vmatprep.subr.mxu0 0.0
        %370 = vmatpush1.msra.mxu0 0.0
        %371 = vmatprep.subr.mxu0 0.0
        %372 = vmatpush1.msra.mxu0 0.0
        %373 = vmatprep.subr.mxu0 0.0
        %374 = vmatpush1.msra.mxu0 0.0
        %375 = vmatprep.subr.mxu0 0.0
        %376 = vmatpush1.msra.mxu0 0.0
        %377 = vmatprep.subr.mxu0 0.0
        %378 = vmatpush1.msra.mxu0 0.0
        %379 = vmatprep.subr.mxu0 0.0
        %380 = vmatpush1.msra.mxu0 0.0
        %381 = vmatprep.subr.mxu0 0.0
        %382 = vmatpush1.msra.mxu0 0.0
        %383 = vmatprep.subr.mxu0 0.0
        %384 = vmatpush1.msra.mxu0 0.0
        %385 = vmatprep.subr.mxu0 0.0
        %386 = vmatpush1.msra.mxu0 0.0
        %387 = vmatprep.subr.mxu0 0.0
        %388 = vmatpush1.msra.mxu0 0.0
        %389 = vmatprep.mubr.f32.mxu0 0.0
        %390 = vmatmul.mubr.f32.gmra.mrb[0].mxu0 %v320
        %v391 = vpop.f32.mrb[0].mxu0
        %v392 = vadd.f32 %v311, %v391
        %v393 = vpop.f32.mrb[0].mxu0
        %v394 = vadd.f32 %v311, %v393
        %395 = vmatprep.mubr.f32.mxu0 0.0
        %396 = vmatmul.mubr.f32.gmra.mrb[0].mxu0 %v323
        %v397 = vpop.f32.mrb[0].mxu0
        %v398 = vadd.f32 %v316, %v397
        %v399 = vpop.f32.mrb[0].mxu0
        %v400 = vadd.f32 %v316, %v399
        %401 = vdwg.mxu0
        %402 = vmatprep.subr.mxu0 %v300
        %403 = vmatpush1.msra.mxu0 %v299
        %404 = vmatprep.subr.mxu0 0.0
        %405 = vmatpush1.msra.mxu0 0.0
        %406 = vmatprep.subr.mxu0 0.0
        %407 = vmatpush1.msra.mxu0 0.0
        %408 = vmatprep.subr.mxu0 0.0
        %409 = vmatpush1.msra.mxu0 0.0
        %410 = vmatprep.subr.mxu0 0.0
        %411 = vmatpush1.msra.mxu0 0.0
        %412 = vmatprep.subr.mxu0 0.0
        %413 = vmatpush1.msra.mxu0 0.0
        %414 = vmatprep.subr.mxu0 0.0
        %415 = vmatpush1.msra.mxu0 0.0
        %416 = vmatprep.subr.mxu0 0.0
        %417 = vmatpush1.msra.mxu0 0.0
        %418 = vmatprep.subr.mxu0 0.0
        %419 = vmatpush1.msra.mxu0 0.0
        %420 = vmatprep.subr.mxu0 0.0
        %421 = vmatpush1.msra.mxu0 0.0
        %422 = vmatprep.subr.mxu0 0.0
        %423 = vmatpush1.msra.mxu0 0.0
        %424 = vmatprep.subr.mxu0 0.0
        %425 = vmatpush1.msra.mxu0 0.0
        %426 = vmatprep.subr.mxu0 0.0
        %427 = vmatpush1.msra.mxu0 0.0
        %428 = vmatprep.subr.mxu0 0.0
        %429 = vmatpush1.msra.mxu0 0.0
        %430 = vmatprep.subr.mxu0 0.0
        %431 = vmatpush1.msra.mxu0 0.0
        %432 = vmatprep.subr.mxu0 0.0
        %433 = vmatpush1.msra.mxu0 0.0
        %434 = vmatprep.subr.mxu0 0.0
        %435 = vmatpush1.msra.mxu0 0.0
        %436 = vmatprep.subr.mxu0 0.0
        %437 = vmatpush1.msra.mxu0 0.0
        %438 = vmatprep.subr.mxu0 0.0
        %439 = vmatpush1.msra.mxu0 0.0
        %440 = vmatprep.subr.mxu0 0.0
        %441 = vmatpush1.msra.mxu0 0.0
        %442 = vmatprep.subr.mxu0 0.0
        %443 = vmatpush1.msra.mxu0 0.0
        %444 = vmatprep.subr.mxu0 0.0
        %445 = vmatpush1.msra.mxu0 0.0
        %446 = vmatprep.subr.mxu0 0.0
        %447 = vmatpush1.msra.mxu0 0.0
        %448 = vmatprep.subr.mxu0 0.0
        %449 = vmatpush1.msra.mxu0 0.0
        %450 = vmatprep.subr.mxu0 0.0
        %451 = vmatpush1.msra.mxu0 0.0
        %452 = vmatprep.subr.mxu0 0.0
        %453 = vmatpush1.msra.mxu0 0.0
        %454 = vmatprep.subr.mxu0 0.0
        %455 = vmatpush1.msra.mxu0 0.0
        %456 = vmatprep.subr.mxu0 0.0
        %457 = vmatpush1.msra.mxu0 0.0
        %458 = vmatprep.subr.mxu0 0.0
        %459 = vmatpush1.msra.mxu0 0.0
        %460 = vmatprep.subr.mxu0 0.0
        %461 = vmatpush1.msra.mxu0 0.0
        %462 = vmatprep.subr.mxu0 0.0
        %463 = vmatpush1.msra.mxu0 0.0
        %464 = vmatprep.subr.mxu0 0.0
        %465 = vmatpush1.msra.mxu0 0.0
        %466 = vmatprep.mubr.f32.mxu0 0.0
        %467 = vmatmul.mubr.f32.gmra.mrb[0].mxu0 %v320
        %v468 = vpop.f32.mrb[0].mxu0
        %v469 = vadd.f32 %v311, %v468
        %v470 = vpop.f32.mrb[0].mxu0
        %v471 = vadd.f32 %v311, %v470
        %472 = vmatprep.mubr.f32.mxu0 0.0
        %473 = vmatmul.mubr.f32.gmra.mrb[0].mxu0 %v323
        %v474 = vpop.f32.mrb[0].mxu0
        %v475 = vadd.f32 %v316, %v474
        %v476 = vpop.f32.mrb[0].mxu0
        %v477 = vadd.f32 %v316, %v476
        %478 = vdwg.mxu0
        %vm479 = vcmp.ge.f32.partialorder %v392, 0.0
        %vm480 = vcmp.ge.f32.partialorder %v394, 0.0
        %vm481 = vcmp.ge.f32.partialorder %v469, 0.0
        %vm482 = vcmp.ge.f32.partialorder %v471, 0.0
        %vm483 = vcmp.ge.f32.partialorder %v398, 0.0
        %vm484 = vcmp.ge.f32.partialorder %v400, 0.0
        %vm485 = vcmp.ge.f32.partialorder %v475, 0.0
        %vm486 = vcmp.ge.f32.partialorder %v477, 0.0
        %v487 = vmul.f32 %v392, 0.01
        %v488 = vmul.f32 %v394, 0.01
        %v489 = vmul.f32 %v469, 0.01
        %v490 = vmul.f32 %v471, 0.01
        %v491 = vmul.f32 %v398, 0.01
        %v492 = vmul.f32 %v400, 0.01
        %v493 = vmul.f32 %v475, 0.01
        %v494 = vmul.f32 %v477, 0.01
        %v495 = vsel %vm479, %v392, %v487
        %v496 = vsel %vm480, %v394, %v488
        %v497 = vsel %vm481, %v469, %v489
        %v498 = vsel %vm482, %v471, %v490
        %v499 = vsel %vm483, %v398, %v491
        %v500 = vsel %vm484, %v400, %v492
        %v501 = vsel %vm485, %v475, %v493
        %v502 = vsel %vm486, %v477, %v494
        %v503 = vld [vmem:[%s3] sm:$0xff]
        %v504 = vld [vmem:[%s3 + $0x8] sm:$0xff]
        %506 = vset.pattern.permute.xlu0 0
        %507 = vperm.xlu0 %506, %v303
        %v508 = vpop.permute.xlu0 %507
        %511 = vset.pattern.permute.xlu0 0
        %512 = vperm.xlu0 %511, %v304
        %v513 = vpop.permute.xlu0 %512
        %vm515 = vcmask 130048
        %v517 = vsel %vm515, %v503, 0
        %v520 = vsel %vm515, %v504, 0
        %522 = vmatprep.subr.mxu0 %v496
        %523 = vmatpush1.msra.mxu0 %v495
        %524 = vmatprep.subr.mxu0 %v500
        %525 = vmatpush1.msra.mxu0 %v499
        %526 = vmatprep.subr.mxu0 0.0
        %527 = vmatpush1.msra.mxu0 0.0
        %528 = vmatprep.subr.mxu0 0.0
        %529 = vmatpush1.msra.mxu0 0.0
        %530 = vmatprep.subr.mxu0 0.0
        %531 = vmatpush1.msra.mxu0 0.0
        %532 = vmatprep.subr.mxu0 0.0
        %533 = vmatpush1.msra.mxu0 0.0
        %534 = vmatprep.subr.mxu0 0.0
        %535 = vmatpush1.msra.mxu0 0.0
        %536 = vmatprep.subr.mxu0 0.0
        %537 = vmatpush1.msra.mxu0 0.0
        %538 = vmatprep.subr.mxu0 0.0
        %539 = vmatpush1.msra.mxu0 0.0
        %540 = vmatprep.subr.mxu0 0.0
        %541 = vmatpush1.msra.mxu0 0.0
        %542 = vmatprep.subr.mxu0 0.0
        %543 = vmatpush1.msra.mxu0 0.0
        %544 = vmatprep.subr.mxu0 0.0
        %545 = vmatpush1.msra.mxu0 0.0
        %546 = vmatprep.subr.mxu0 0.0
        %547 = vmatpush1.msra.mxu0 0.0
        %548 = vmatprep.subr.mxu0 0.0
        %549 = vmatpush1.msra.mxu0 0.0
        %550 = vmatprep.subr.mxu0 0.0
        %551 = vmatpush1.msra.mxu0 0.0
        %552 = vmatprep.subr.mxu0 0.0
        %553 = vmatpush1.msra.mxu0 0.0
        %554 = vmatprep.subr.mxu0 0.0
        %555 = vmatpush1.msra.mxu0 0.0
        %556 = vmatprep.subr.mxu0 0.0
        %557 = vmatpush1.msra.mxu0 0.0
        %558 = vmatprep.subr.mxu0 0.0
        %559 = vmatpush1.msra.mxu0 0.0
        %560 = vmatprep.subr.mxu0 0.0
        %561 = vmatpush1.msra.mxu0 0.0
        %562 = vmatprep.subr.mxu0 0.0
        %563 = vmatpush1.msra.mxu0 0.0
        %564 = vmatprep.subr.mxu0 0.0
        %565 = vmatpush1.msra.mxu0 0.0
        %566 = vmatprep.subr.mxu0 0.0
        %567 = vmatpush1.msra.mxu0 0.0
        %568 = vmatprep.subr.mxu0 0.0
        %569 = vmatpush1.msra.mxu0 0.0
        %570 = vmatprep.subr.mxu0 0.0
        %571 = vmatpush1.msra.mxu0 0.0
        %572 = vmatprep.subr.mxu0 0.0
        %573 = vmatpush1.msra.mxu0 0.0
        %574 = vmatprep.subr.mxu0 0.0
        %575 = vmatpush1.msra.mxu0 0.0
        %576 = vmatprep.subr.mxu0 0.0
        %577 = vmatpush1.msra.mxu0 0.0
        %578 = vmatprep.subr.mxu0 0.0
        %579 = vmatpush1.msra.mxu0 0.0
        %580 = vmatprep.subr.mxu0 0.0
        %581 = vmatpush1.msra.mxu0 0.0
        %582 = vmatprep.subr.mxu0 0.0
        %583 = vmatpush1.msra.mxu0 0.0
        %584 = vmatprep.subr.mxu0 0.0
        %585 = vmatpush1.msra.mxu0 0.0
        %586 = vmatprep.mubr.f32.mxu0 0.0
        %587 = vmatmul.mubr.f32.gmra.mrb[0].mxu0 %v517
        %v588 = vpop.f32.mrb[0].mxu0
        %v589 = vadd.f32 %v508, %v588
        %v590 = vpop.f32.mrb[0].mxu0
        %v591 = vadd.f32 %v508, %v590
        %592 = vmatprep.mubr.f32.mxu0 0.0
        %593 = vmatmul.mubr.f32.gmra.mrb[0].mxu0 %v520
        %v594 = vpop.f32.mrb[0].mxu0
        %v595 = vadd.f32 %v513, %v594
        %v596 = vpop.f32.mrb[0].mxu0
        %v597 = vadd.f32 %v513, %v596
        %598 = vdwg.mxu0
        %599 = vmatprep.subr.mxu0 %v498
        %600 = vmatpush1.msra.mxu0 %v497
        %601 = vmatprep.subr.mxu0 %v502
        %602 = vmatpush1.msra.mxu0 %v501
        %603 = vmatprep.subr.mxu0 0.0
        %604 = vmatpush1.msra.mxu0 0.0
        %605 = vmatprep.subr.mxu0 0.0
        %606 = vmatpush1.msra.mxu0 0.0
        %607 = vmatprep.subr.mxu0 0.0
        %608 = vmatpush1.msra.mxu0 0.0
        %609 = vmatprep.subr.mxu0 0.0
        %610 = vmatpush1.msra.mxu0 0.0
        %611 = vmatprep.subr.mxu0 0.0
        %612 = vmatpush1.msra.mxu0 0.0
        %613 = vmatprep.subr.mxu0 0.0
        %614 = vmatpush1.msra.mxu0 0.0
        %615 = vmatprep.subr.mxu0 0.0
        %616 = vmatpush1.msra.mxu0 0.0
        %617 = vmatprep.subr.mxu0 0.0
        %618 = vmatpush1.msra.mxu0 0.0
        %619 = vmatprep.subr.mxu0 0.0
        %620 = vmatpush1.msra.mxu0 0.0
        %621 = vmatprep.subr.mxu0 0.0
        %622 = vmatpush1.msra.mxu0 0.0
        %623 = vmatprep.subr.mxu0 0.0
        %624 = vmatpush1.msra.mxu0 0.0
        %625 = vmatprep.subr.mxu0 0.0
        %626 = vmatpush1.msra.mxu0 0.0
        %627 = vmatprep.subr.mxu0 0.0
        %628 = vmatpush1.msra.mxu0 0.0
        %629 = vmatprep.subr.mxu0 0.0
        %630 = vmatpush1.msra.mxu0 0.0
        %631 = vmatprep.subr.mxu0 0.0
        %632 = vmatpush1.msra.mxu0 0.0
        %633 = vmatprep.subr.mxu0 0.0
        %634 = vmatpush1.msra.mxu0 0.0
        %635 = vmatprep.subr.mxu0 0.0
        %636 = vmatpush1.msra.mxu0 0.0
        %637 = vmatprep.subr.mxu0 0.0
        %638 = vmatpush1.msra.mxu0 0.0
        %639 = vmatprep.subr.mxu0 0.0
        %640 = vmatpush1.msra.mxu0 0.0
        %641 = vmatprep.subr.mxu0 0.0
        %642 = vmatpush1.msra.mxu0 0.0
        %643 = vmatprep.subr.mxu0 0.0
        %644 = vmatpush1.msra.mxu0 0.0
        %645 = vmatprep.subr.mxu0 0.0
        %646 = vmatpush1.msra.mxu0 0.0
        %647 = vmatprep.subr.mxu0 0.0
        %648 = vmatpush1.msra.mxu0 0.0
        %649 = vmatprep.subr.mxu0 0.0
        %650 = vmatpush1.msra.mxu0 0.0
        %651 = vmatprep.subr.mxu0 0.0
        %652 = vmatpush1.msra.mxu0 0.0
        %653 = vmatprep.subr.mxu0 0.0
        %654 = vmatpush1.msra.mxu0 0.0
        %655 = vmatprep.subr.mxu0 0.0
        %656 = vmatpush1.msra.mxu0 0.0
        %657 = vmatprep.subr.mxu0 0.0
        %658 = vmatpush1.msra.mxu0 0.0
        %659 = vmatprep.subr.mxu0 0.0
        %660 = vmatpush1.msra.mxu0 0.0
        %661 = vmatprep.subr.mxu0 0.0
        %662 = vmatpush1.msra.mxu0 0.0
        %663 = vmatprep.mubr.f32.mxu0 0.0
        %664 = vmatmul.mubr.f32.gmra.mrb[0].mxu0 %v517
        %v665 = vpop.f32.mrb[0].mxu0
        %v666 = vadd.f32 %v508, %v665
        %v667 = vpop.f32.mrb[0].mxu0
        %v668 = vadd.f32 %v508, %v667
        %669 = vmatprep.mubr.f32.mxu0 0.0
        %670 = vmatmul.mubr.f32.gmra.mrb[0].mxu0 %v520
        %v671 = vpop.f32.mrb[0].mxu0
        %v672 = vadd.f32 %v513, %v671
        %v673 = vpop.f32.mrb[0].mxu0
        %v674 = vadd.f32 %v513, %v673
        %675 = vdwg.mxu0
        %vm676 = vcmp.ge.f32.partialorder %v589, 0.0
        %vm677 = vcmp.ge.f32.partialorder %v591, 0.0
        %vm678 = vcmp.ge.f32.partialorder %v666, 0.0
        %vm679 = vcmp.ge.f32.partialorder %v668, 0.0
        %vm680 = vcmp.ge.f32.partialorder %v595, 0.0
        %vm681 = vcmp.ge.f32.partialorder %v597, 0.0
        %vm682 = vcmp.ge.f32.partialorder %v672, 0.0
        %vm683 = vcmp.ge.f32.partialorder %v674, 0.0
        %v684 = vmul.f32 %v589, 0.01
        %v685 = vmul.f32 %v591, 0.01
        %v686 = vmul.f32 %v666, 0.01
        %v687 = vmul.f32 %v668, 0.01
        %v688 = vmul.f32 %v595, 0.01
        %v689 = vmul.f32 %v597, 0.01
        %v690 = vmul.f32 %v672, 0.01
        %v691 = vmul.f32 %v674, 0.01
        %v692 = vsel %vm676, %v589, %v684
        %v693 = vsel %vm677, %v591, %v685
        %v694 = vsel %vm678, %v666, %v686
        %v695 = vsel %vm679, %v668, %v687
        %v696 = vsel %vm680, %v595, %v688
        %v697 = vsel %vm681, %v597, %v689
        %v698 = vsel %vm682, %v672, %v690
        %v699 = vsel %vm683, %v674, %v691
        %v700 = vld [vmem:[%s5] sm:$0xf]
        %702 = vset.pattern.permute.xlu0 0
        %703 = vperm.xlu0 %702, %v305
        %v704 = vpop.permute.xlu0 %703
        %v707 = vsel %vm515, %v700, 0
        %709 = vmatprep.subr.mxu0 %v693
        %710 = vmatpush1.msra.mxu0 %v692
        %711 = vmatprep.subr.mxu0 %v697
        %712 = vmatpush1.msra.mxu0 %v696
        %713 = vmatprep.subr.mxu0 0.0
        %714 = vmatpush1.msra.mxu0 0.0
        %715 = vmatprep.subr.mxu0 0.0
        %716 = vmatpush1.msra.mxu0 0.0
        %717 = vmatprep.subr.mxu0 0.0
        %718 = vmatpush1.msra.mxu0 0.0
        %719 = vmatprep.subr.mxu0 0.0
        %720 = vmatpush1.msra.mxu0 0.0
        %721 = vmatprep.subr.mxu0 0.0
        %722 = vmatpush1.msra.mxu0 0.0
        %723 = vmatprep.subr.mxu0 0.0
        %724 = vmatpush1.msra.mxu0 0.0
        %725 = vmatprep.subr.mxu0 0.0
        %726 = vmatpush1.msra.mxu0 0.0
        %727 = vmatprep.subr.mxu0 0.0
        %728 = vmatpush1.msra.mxu0 0.0
        %729 = vmatprep.subr.mxu0 0.0
        %730 = vmatpush1.msra.mxu0 0.0
        %731 = vmatprep.subr.mxu0 0.0
        %732 = vmatpush1.msra.mxu0 0.0
        %733 = vmatprep.subr.mxu0 0.0
        %734 = vmatpush1.msra.mxu0 0.0
        %735 = vmatprep.subr.mxu0 0.0
        %736 = vmatpush1.msra.mxu0 0.0
        %737 = vmatprep.subr.mxu0 0.0
        %738 = vmatpush1.msra.mxu0 0.0
        %739 = vmatprep.subr.mxu0 0.0
        %740 = vmatpush1.msra.mxu0 0.0
        %741 = vmatprep.subr.mxu0 0.0
        %742 = vmatpush1.msra.mxu0 0.0
        %743 = vmatprep.subr.mxu0 0.0
        %744 = vmatpush1.msra.mxu0 0.0
        %745 = vmatprep.subr.mxu0 0.0
        %746 = vmatpush1.msra.mxu0 0.0
        %747 = vmatprep.subr.mxu0 0.0
        %748 = vmatpush1.msra.mxu0 0.0
        %749 = vmatprep.subr.mxu0 0.0
        %750 = vmatpush1.msra.mxu0 0.0
        %751 = vmatprep.subr.mxu0 0.0
        %752 = vmatpush1.msra.mxu0 0.0
        %753 = vmatprep.subr.mxu0 0.0
        %754 = vmatpush1.msra.mxu0 0.0
        %755 = vmatprep.subr.mxu0 0.0
        %756 = vmatpush1.msra.mxu0 0.0
        %757 = vmatprep.subr.mxu0 0.0
        %758 = vmatpush1.msra.mxu0 0.0
        %759 = vmatprep.subr.mxu0 0.0
        %760 = vmatpush1.msra.mxu0 0.0
        %761 = vmatprep.subr.mxu0 0.0
        %762 = vmatpush1.msra.mxu0 0.0
        %763 = vmatprep.subr.mxu0 0.0
        %764 = vmatpush1.msra.mxu0 0.0
        %765 = vmatprep.subr.mxu0 0.0
        %766 = vmatpush1.msra.mxu0 0.0
        %767 = vmatprep.subr.mxu0 0.0
        %768 = vmatpush1.msra.mxu0 0.0
        %769 = vmatprep.subr.mxu0 0.0
        %770 = vmatpush1.msra.mxu0 0.0
        %771 = vmatprep.subr.mxu0 0.0
        %772 = vmatpush1.msra.mxu0 0.0
        %773 = vmatprep.mubr.f32.mxu0 0.0
        %774 = vmatmul.mubr.f32.gmra.mrb[0].mxu0 %v707
        %v775 = vpop.f32.mrb[0].mxu0
        %v776 = vadd.f32 %v704, %v775
        %v777 = vpop.f32.mrb[0].mxu0
        %v778 = vadd.f32 %v704, %v777
        %779 = vdwg.mxu0
        %780 = vmatprep.subr.mxu0 %v695
        %781 = vmatpush1.msra.mxu0 %v694
        %782 = vmatprep.subr.mxu0 %v699
        %783 = vmatpush1.msra.mxu0 %v698
        %784 = vmatprep.subr.mxu0 0.0
        %785 = vmatpush1.msra.mxu0 0.0
        %786 = vmatprep.subr.mxu0 0.0
        %787 = vmatpush1.msra.mxu0 0.0
        %788 = vmatprep.subr.mxu0 0.0
        %789 = vmatpush1.msra.mxu0 0.0
        %790 = vmatprep.subr.mxu0 0.0
        %791 = vmatpush1.msra.mxu0 0.0
        %792 = vmatprep.subr.mxu0 0.0
        %793 = vmatpush1.msra.mxu0 0.0
        %794 = vmatprep.subr.mxu0 0.0
        %795 = vmatpush1.msra.mxu0 0.0
        %796 = vmatprep.subr.mxu0 0.0
        %797 = vmatpush1.msra.mxu0 0.0
        %798 = vmatprep.subr.mxu0 0.0
        %799 = vmatpush1.msra.mxu0 0.0
        %800 = vmatprep.subr.mxu0 0.0
        %801 = vmatpush1.msra.mxu0 0.0
        %802 = vmatprep.subr.mxu0 0.0
        %803 = vmatpush1.msra.mxu0 0.0
        %804 = vmatprep.subr.mxu0 0.0
        %805 = vmatpush1.msra.mxu0 0.0
        %806 = vmatprep.subr.mxu0 0.0
        %807 = vmatpush1.msra.mxu0 0.0
        %808 = vmatprep.subr.mxu0 0.0
        %809 = vmatpush1.msra.mxu0 0.0
        %810 = vmatprep.subr.mxu0 0.0
        %811 = vmatpush1.msra.mxu0 0.0
        %812 = vmatprep.subr.mxu0 0.0
        %813 = vmatpush1.msra.mxu0 0.0
        %814 = vmatprep.subr.mxu0 0.0
        %815 = vmatpush1.msra.mxu0 0.0
        %816 = vmatprep.subr.mxu0 0.0
        %817 = vmatpush1.msra.mxu0 0.0
        %818 = vmatprep.subr.mxu0 0.0
        %819 = vmatpush1.msra.mxu0 0.0
        %820 = vmatprep.subr.mxu0 0.0
        %821 = vmatpush1.msra.mxu0 0.0
        %822 = vmatprep.subr.mxu0 0.0
        %823 = vmatpush1.msra.mxu0 0.0
        %824 = vmatprep.subr.mxu0 0.0
        %825 = vmatpush1.msra.mxu0 0.0
        %826 = vmatprep.subr.mxu0 0.0
        %827 = vmatpush1.msra.mxu0 0.0
        %828 = vmatprep.subr.mxu0 0.0
        %829 = vmatpush1.msra.mxu0 0.0
        %830 = vmatprep.subr.mxu0 0.0
        %831 = vmatpush1.msra.mxu0 0.0
        %832 = vmatprep.subr.mxu0 0.0
        %833 = vmatpush1.msra.mxu0 0.0
        %834 = vmatprep.subr.mxu0 0.0
        %835 = vmatpush1.msra.mxu0 0.0
        %836 = vmatprep.subr.mxu0 0.0
        %837 = vmatpush1.msra.mxu0 0.0
        %838 = vmatprep.subr.mxu0 0.0
        %839 = vmatpush1.msra.mxu0 0.0
        %840 = vmatprep.subr.mxu0 0.0
        %841 = vmatpush1.msra.mxu0 0.0
        %842 = vmatprep.subr.mxu0 0.0
        %843 = vmatpush1.msra.mxu0 0.0
        %844 = vmatprep.mubr.f32.mxu0 0.0
        %845 = vmatmul.mubr.f32.gmra.mrb[0].mxu0 %v707
        %v846 = vpop.f32.mrb[0].mxu0
        %v847 = vadd.f32 %v704, %v846
        %v848 = vpop.f32.mrb[0].mxu0
        %v849 = vadd.f32 %v704, %v848
        %850 = vdwg.mxu0
        %vm851 = vcmask 1043456
        %v852 = vsel %vm851, %v776, -inf
        %v853 = vrot.slane %v852, 4
        %v854 = vmax.f32 %v852, %v853
        %v855 = vrot.slane %v854, 2
        %v856 = vmax.f32 %v854, %v855
        %v857 = vrot.slane %v856, 1
        %v858 = vmax.f32 %v856, %v857
        %v859 = vsel %vm851, %v778, -inf
        %v860 = vrot.slane %v859, 4
        %v861 = vmax.f32 %v859, %v860
        %v862 = vrot.slane %v861, 2
        %v863 = vmax.f32 %v861, %v862
        %v864 = vrot.slane %v863, 1
        %v865 = vmax.f32 %v863, %v864
        %v866 = vsel %vm851, %v847, -inf
        %v867 = vrot.slane %v866, 4
        %v868 = vmax.f32 %v866, %v867
        %v869 = vrot.slane %v868, 2
        %v870 = vmax.f32 %v868, %v869
        %v871 = vrot.slane %v870, 1
        %v872 = vmax.f32 %v870, %v871
        %v873 = vsel %vm851, %v849, -inf
        %v874 = vrot.slane %v873, 4
        %v875 = vmax.f32 %v873, %v874
        %v876 = vrot.slane %v875, 2
        %v877 = vmax.f32 %v875, %v876
        %v878 = vrot.slane %v877, 1
        %v879 = vmax.f32 %v877, %v878
        %v880 = vsub.f32 %v776, %v858
        %v881 = vsub.f32 %v778, %v865
        %v882 = vsub.f32 %v847, %v872
        %v883 = vsub.f32 %v849, %v879
        %v884 = vmul.f32 %v880, 1.442695
        %v885 = vpow.pop %v884
        %v886 = vmul.f32 %v881, 1.442695
        %v887 = vpow.pop %v886
        %v888 = vmul.f32 %v882, 1.442695
        %v889 = vpow.pop %v888
        %v890 = vmul.f32 %v883, 1.442695
        %v891 = vpow.pop %v890
        %v892 = vsel %vm851, %v885, 0.0
        %v893 = vrot.slane %v892, 4
        %v894 = vadd.f32 %v892, %v893
        %v895 = vrot.slane %v894, 2
        %v896 = vadd.f32 %v894, %v895
        %v897 = vrot.slane %v896, 1
        %v898 = vadd.f32 %v896, %v897
        %v899 = vsel %vm851, %v887, 0.0
        %v900 = vrot.slane %v899, 4
        %v901 = vadd.f32 %v899, %v900
        %v902 = vrot.slane %v901, 2
        %v903 = vadd.f32 %v901, %v902
        %v904 = vrot.slane %v903, 1
        %v905 = vadd.f32 %v903, %v904
        %v906 = vsel %vm851, %v889, 0.0
        %v907 = vrot.slane %v906, 4
        %v908 = vadd.f32 %v906, %v907
        %v909 = vrot.slane %v908, 2
        %v910 = vadd.f32 %v908, %v909
        %v911 = vrot.slane %v910, 1
        %v912 = vadd.f32 %v910, %v911
        %v913 = vsel %vm851, %v891, 0.0
        %v914 = vrot.slane %v913, 4
        %v915 = vadd.f32 %v913, %v914
        %v916 = vrot.slane %v915, 2
        %v917 = vadd.f32 %v915, %v916
        %v918 = vrot.slane %v917, 1
        %v919 = vadd.f32 %v917, %v918
        %v920 = vrcp.pop %v898
        %v921 = vrcp.pop %v905
        %v922 = vrcp.pop %v912
        %v923 = vrcp.pop %v919
        %v924 = vmul.f32 %v885, %v920
        %v925 = vmul.f32 %v887, %v921
        %v926 = vmul.f32 %v889, %v922
        %v927 = vmul.f32 %v891, %v923
        %v932 = vcombine.low %v924, %v925
        %v933 = vcombine.low %v926, %v927
        %936 = vst [vmem:[%s294] sm:$0xff] %v932
        %937 = vst [vmem:[%s294 + $0x8] sm:$0xff] %v933
        %s938 = sand.u32 %s184, 1
        %s939 = scalar_lea.sflag [#allocation4], %s938
        %s940 = sand.u32 %s184, 1
        %s941 = smul.addr %s940, 16
        %s942 = scalar_lea.vmem [#allocation5], %s941
        // Predicated region
        $region53: #{tpu_custom_call.1} parent=47 // pred_check
          %p943 = pneg %p194
        $region54: #{tpu_custom_call.1} parent=47 // pred_check_branch
          %945 = sbr.rel (%p943) target = $region56
        $region55: #{tpu_custom_call.1} parent=47 // pred_region
          %s946 = smul.u32 4, %s24
          %s948 = ssub.s32 256, 256
          %949 = vsyncadd %s939, %s948
          %s950 = smul.addr %s946, 64
          %s951 = scalar_lea.hbm %s7, %s950
          %s953 = sshll.u32 %s942, 4
          %s954 = int_to_ptr.vmem [resolvable:$true] %s953
          %956 = dma.vmem_to_hbm [thread:$0]  %s954, 256, %s951, %s939
        $region56: #{tpu_custom_call.1} parent=47 // pred_fallthru
          _
      $region48: #{tpu_custom_call.1} parent=5 // pred_fallthru
        _
      %p957 = scmp.le.s32.totalorder 2, %s19
      // Predicated region
      $region57: #{tpu_custom_call.1} parent=5 // pred_check
        %p958 = pneg %p957
      $region58: #{tpu_custom_call.1} parent=5 // pred_check_branch
        %960 = sbr.rel (%p958) target = $region60
      $region59: #{tpu_custom_call.1} parent=5 // pred_region
        %s961 = ssub.s32 %s19, 2
        // Predicated region
        $region61: #{tpu_custom_call.1} parent=59 // pred_check
          %p962 = pneg %p200
        $region62: #{tpu_custom_call.1} parent=59 // pred_check_branch
          %964 = sbr.rel (%p962) target = $region64
        $region63: #{tpu_custom_call.1} parent=59 // pred_region
          %s965 = sand.u32 %s185, 1
          %s966 = scalar_lea.sflag [#allocation4], %s965
          %s967 = sand.u32 %s185, 1
          %s968 = smul.addr %s967, 16
          %s969 = scalar_lea.vmem [#allocation5], %s968
          %970 = dma.done %s966, 256
        $region64: #{tpu_custom_call.1} parent=59 // pred_fallthru
          _
      $region60: #{tpu_custom_call.1} parent=5 // pred_fallthru
        _
    $region6: #{tpu_custom_call.1} parent=1 // loop_footer
      %s23 = sadd.s32 1, %s19
    $region7: #{tpu_custom_call.1} parent=1 // loop_footer_branch
      %18 = sbr.rel target = $region3
    $region8: #{tpu_custom_call.1} parent=1 // loop_exit
      _
    %971 = vsyncpa [#allocation3], 1
    %s972 = scalar_lea.sflag [#allocation3], 1
    %973 = vsyncpa %s972, 1
    %974 = vsyncpa [#allocation4], 1
    %s975 = scalar_lea.sflag [#allocation4], 1
    %976 = vsyncpa %s975, 1

</llo_original>
